<compile_context>
chip_gen: v5e
topology: v5e:2x2
jax: 0.10.0
libtpu: 0.0.40
codegen_flags: <defaults>
</compile_context>

<pallas_src>
import functools
import math

import jax
import jax.numpy as jnp
from jax.experimental import pallas as pl
from jax.experimental.pallas import tpu as pltpu


def _mha_core_kernel(*refs, scale, inv_heads, have_bias, need_weights,
                     approx_recip):
    """Fused multi-head attention core for one (batch, L-tile) grid point.

    Refs, in order:
      q_ref    : (1, H, tL, Dh)  compute dtype (bf16/f32)
      k_ref    : (1, H, S,  Dh)
      v_ref    : (1, H, S,  Dh)
      [bias_ref: (tL, S) f32]           only when have_bias
      ctx_ref  : (1, H, tL, Dh)         per-head context (concat folded into
                                         the wrapper output projection)
      [w_ref   : (1, tL, S) f32]        only when need_weights
    """
    q_ref, k_ref, v_ref = refs[0], refs[1], refs[2]
    idx = 3
    bias_ref = None
    if have_bias:
        bias_ref = refs[idx]
        idx += 1
    ctx_ref = refs[idx]
    idx += 1
    w_ref = refs[idx] if need_weights else None

    q = q_ref[0]                       # (H, tL, Dh)
    k = k_ref[0]                       # (H, S,  Dh)
    v = v_ref[0]                       # (H, S,  Dh)

    # scores: batched NT matmul on the MXU, f32 accumulation.
    s = jnp.einsum('hld,hsd->hls', q, k,
                   preferred_element_type=jnp.float32) * scale
    if have_bias:
        s = s + bias_ref[...][None]

    # numerically stable softmax along keys; divide -> EUP reciprocal.
    m = jnp.max(s, axis=-1, keepdims=True)
    e = jnp.exp(s - m)
    inv = pl.reciprocal(jnp.sum(e, axis=-1, keepdims=True), approx=approx_recip)

    # context: feed unnormalized e to the MXU, scale after the matmul
    # ((H,tL,Dh) elements instead of (H,tL,S)).
    ctx = jnp.einsum('hls,hsd->hld', e.astype(v.dtype), v,
                     preferred_element_type=jnp.float32) * inv
    ctx_ref[0] = ctx.astype(ctx_ref.dtype)

    if need_weights:
        # head-averaged softmax probabilities, one dense store per tile.
        w_ref[0] = (jnp.sum(e * inv, axis=0) * inv_heads).astype(w_ref.dtype)


def multihead_attention(query, key, value, *, in_proj_weight, in_proj_bias,
                        out_proj_weight, out_proj_bias, nhead,
                        attn_mask=None, return_attn_weights=True,
                        compute_dtype=jnp.bfloat16, block_l=None):
    """Forward pass matching the SepFormer MultiheadAttention wrapper.

    query: (B, L, E), key/value: (B, S, E); attn_mask: optional 2-D (L, S)
    float (additive) or bool (True = masked) mask.
    Returns attn_output (B, L, E) and, if return_attn_weights, the
    head-averaged attention weights (B, L, S).
    """
    if query.ndim != 3 or key.ndim != 3 or value.ndim != 3:
        raise ValueError("query/key/value must be rank-3 (B, seq, E)")
    B, L, E = query.shape
    S = key.shape[1]
    H = nhead
    if E % H != 0:
        raise ValueError("embed dim must be divisible by nhead")
    Dh = E // H
    cdt = jnp.dtype(compute_dtype)

    # --- packed in-projection, head-major; f32 accumulation, compute-dtype
    # activations (no (B,L,E)<->(B,H,L,Dh) transposes of activations). -------
    Wq, Wk, Wv = jnp.split(in_proj_weight, 3, axis=0)      # each (E, E)
    bq, bk, bv = jnp.split(in_proj_bias, 3, axis=0)        # each (E,)

    def proj(x, W, b):
        y = jnp.einsum('bse,hde->bhsd', x.astype(cdt),
                       W.reshape(H, Dh, E).astype(cdt),
                       preferred_element_type=jnp.float32)
        return (y + b.reshape(1, H, 1, Dh)).astype(cdt)

    qh = proj(query, Wq, bq)       # (B, H, L, Dh)
    kh = proj(key, Wk, bk)         # (B, H, S, Dh)
    vh = proj(value, Wv, bv)       # (B, H, S, Dh)

    have_bias = attn_mask is not None
    if have_bias:
        if attn_mask.dtype == jnp.bool_:
            bias = jnp.where(attn_mask, -jnp.inf, 0.0).astype(jnp.float32)
        else:
            bias = attn_mask.astype(jnp.float32)
        if bias.shape != (L, S):
            raise ValueError("only 2-D (L, S) attn_mask is supported")

    need_weights = bool(return_attn_weights)

    # --- L tiling (both grid axes fully parallel) ----------------------------
    if (block_l is None or L % block_l != 0
            or (block_l != L and block_l % 8 != 0)):
        block_l = L
    n_lt = L // block_l

    kernel = functools.partial(
        _mha_core_kernel,
        scale=1.0 / math.sqrt(Dh),
        inv_heads=1.0 / H,
        have_bias=have_bias,
        need_weights=need_weights,
        approx_recip=(cdt == jnp.dtype(jnp.bfloat16)))

    in_specs = [
        pl.BlockSpec((1, H, block_l, Dh), lambda b, l: (b, 0, l, 0)),
        pl.BlockSpec((1, H, S, Dh), lambda b, l: (b, 0, 0, 0)),
        pl.BlockSpec((1, H, S, Dh), lambda b, l: (b, 0, 0, 0)),
    ]
    inputs = [qh, kh, vh]
    if have_bias:
        in_specs.append(pl.BlockSpec((block_l, S), lambda b, l: (l, 0)))
        inputs.append(bias)

    out_shapes = [jax.ShapeDtypeStruct((B, H, L, Dh), cdt)]
    out_specs = [pl.BlockSpec((1, H, block_l, Dh), lambda b, l: (b, 0, l, 0))]
    if need_weights:
        out_shapes.append(jax.ShapeDtypeStruct((B, L, S), jnp.float32))
        out_specs.append(pl.BlockSpec((1, block_l, S), lambda b, l: (b, l, 0)))

    # --- cost estimate + VMEM budget -----------------------------------------
    flops = 4 * B * H * L * S * Dh                      # QK^T + PV
    bytes_accessed = sum(int(x.size) * x.dtype.itemsize for x in inputs)
    bytes_accessed += B * H * L * Dh * cdt.itemsize
    if need_weights:
        bytes_accessed += B * L * S * 4
    cost = pl.CostEstimate(flops=flops, transcendentals=B * H * L * S,
                           bytes_accessed=bytes_accessed)

    blk_bytes = (H * block_l * Dh + 2 * H * S * Dh) * cdt.itemsize   # q,k,v
    blk_bytes += H * block_l * Dh * cdt.itemsize                     # ctx
    if have_bias:
        blk_bytes += block_l * S * 4
    if need_weights:
        blk_bytes += block_l * S * 4
    tmp_bytes = (4 * H * block_l * S + 2 * H * block_l * Dh) * 4     # f32 temps
    vmem_limit = int(max(16 << 20,
                         min(2 * (2 * blk_bytes + tmp_bytes) + (4 << 20),
                             64 << 20)))

    outs = pl.pallas_call(
        kernel,
        out_shape=tuple(out_shapes) if need_weights else out_shapes[0],
        grid_spec=pltpu.PrefetchScalarGridSpec(
            num_scalar_prefetch=0,
            grid=(B, n_lt),
            in_specs=in_specs,
            out_specs=tuple(out_specs) if need_weights else out_specs[0],
        ),
        compiler_params=pltpu.CompilerParams(
            dimension_semantics=("parallel", "parallel"),
            vmem_limit_bytes=vmem_limit),
        cost_estimate=cost,
    )(*inputs)

    ctx = outs[0] if need_weights else outs
    attn_w = outs[1] if need_weights else None

    # --- output projection; head concat folded into the weight reshape ------
    Wo_h = out_proj_weight.reshape(E, H, Dh).transpose(1, 2, 0).astype(cdt)
    out = jnp.einsum('bhld,hdo->blo', ctx, Wo_h,
                     preferred_element_type=jnp.float32) + out_proj_bias
    out = out.astype(query.dtype)

    if need_weights:
        return out, attn_w
    return out


def _reference_mha(query, key, value, in_w, in_b, out_w, out_b, nhead,
                   attn_mask=None):
    """Pure-JAX mirror of torch.nn.MultiheadAttention forward (eval mode)."""
    B, L, E = query.shape
    S = key.shape[1]
    Dh = E // nhead
    Wq, Wk, Wv = jnp.split(in_w, 3, axis=0)
    bq, bk, bv = jnp.split(in_b, 3, axis=0)
    qp = (query @ Wq.T + bq).reshape(B, L, nhead, Dh).transpose(0, 2, 1, 3)
    kp = (key @ Wk.T + bk).reshape(B, S, nhead, Dh).transpose(0, 2, 1, 3)
    vp = (value @ Wv.T + bv).reshape(B, S, nhead, Dh).transpose(0, 2, 1, 3)
    s = jnp.einsum('bhld,bhsd->bhls', qp, kp) / jnp.sqrt(jnp.float32(Dh))
    if attn_mask is not None:
        s = s + attn_mask
    p = jax.nn.softmax(s, axis=-1)
    ctx = jnp.einsum('bhls,bhsd->bhld', p, vp)
    c = ctx.transpose(0, 2, 1, 3).reshape(B, L, E)
    out = c @ out_w.T + out_b
    return out, jnp.mean(p, axis=1)


if __name__ == "__main__":
    key0 = jax.random.PRNGKey(0)
    ks = jax.random.split(key0, 8)

    B, L, S, E, H = 2, 16, 16, 32, 4

    q = jax.random.normal(ks[0], (B, L, E), dtype=jnp.float32)
    k = jax.random.normal(ks[1], (B, S, E), dtype=jnp.float32)
    v = jax.random.normal(ks[2], (B, S, E), dtype=jnp.float32)

    in_w = 0.1 * jax.random.normal(ks[3], (3 * E, E), dtype=jnp.float32)
    in_b = 0.1 * jax.random.normal(ks[4], (3 * E,), dtype=jnp.float32)
    out_w = 0.1 * jax.random.normal(ks[5], (E, E), dtype=jnp.float32)
    out_b = 0.1 * jax.random.normal(ks[6], (E,), dtype=jnp.float32)
    mask = 0.5 * jax.random.normal(ks[7], (L, S), dtype=jnp.float32)

    ref_out, ref_w = _reference_mha(q, k, v, in_w, in_b, out_w, out_b, H)
    ref_out_m, ref_w_m = _reference_mha(q, k, v, in_w, in_b, out_w, out_b, H,
                                        attn_mask=mask)

    # ---- 1) f32 compute path, no mask, 2 L-tiles: tight tolerance ----------
    out, w = multihead_attention(
        q, k, v, in_proj_weight=in_w, in_proj_bias=in_b,
        out_proj_weight=out_w, out_proj_bias=out_b, nhead=H,
        compute_dtype=jnp.float32, block_l=8)
    out, w = jax.block_until_ready((out, w))
    assert out.shape == (B, L, E)
    assert w.shape == (B, L, S)
    assert jnp.max(jnp.abs(out - ref_out)) < 1e-4
    assert jnp.max(jnp.abs(w - ref_w)) < 1e-5

    # ---- 2) bf16 MXU path with additive float attn_mask --------------------
    out_m, w_m = multihead_attention(
        q, k, v, in_proj_weight=in_w, in_proj_bias=in_b,
        out_proj_weight=out_w, out_proj_bias=out_b, nhead=H,
        attn_mask=mask, compute_dtype=jnp.bfloat16, block_l=8)
    out_m, w_m = jax.block_until_ready((out_m, w_m))
    assert jnp.max(jnp.abs(out_m - ref_out_m)) < 5e-2
    assert jnp.max(jnp.abs(w_m - ref_w_m)) < 5e-3

    # ---- 3) need_weights=False specialization (no weights output at all) ---
    out_nw = multihead_attention(
        q, k, v, in_proj_weight=in_w, in_proj_bias=in_b,
        out_proj_weight=out_w, out_proj_bias=out_b, nhead=H,
        return_attn_weights=False, compute_dtype=jnp.bfloat16)
    out_nw = jax.block_until_ready(out_nw)
    assert out_nw.shape == (B, L, E)
    assert jnp.max(jnp.abs(out_nw - ref_out)) < 5e-2

    print("KERNEL_OK")
</pallas_src>

<mosaic_0001>
module attributes {stable_mosaic.version = 11 : i64} {
  func.func @_mha_core_kernel(%arg0: i32, %arg1: i32, %arg2: memref<1x4x8x8xf32, #tpu.memory_space<vmem>>, %arg3: memref<1x4x16x8xf32, #tpu.memory_space<vmem>>, %arg4: memref<1x4x16x8xf32, #tpu.memory_space<vmem>>, %arg5: memref<1x4x8x8xf32, #tpu.memory_space<vmem>>, %arg6: memref<1x8x16xf32, #tpu.memory_space<vmem>>) attributes {dimension_semantics = [#tpu.dimension_semantics<parallel>, #tpu.dimension_semantics<parallel>], iteration_bounds = array<i64: 2, 2>, scalar_prefetch = 0 : i64, scratch_operands = 0 : i64, tpu.core_type = #tpu.core_type<tc>, window_params = [{transform_indices = @transform_0, window_bounds = array<i64: 1, 4, 8, 8>}, {transform_indices = @transform_1, window_bounds = array<i64: 1, 4, 16, 8>}, {transform_indices = @transform_2, window_bounds = array<i64: 1, 4, 16, 8>}, {transform_indices = @transform_3, window_bounds = array<i64: 1, 4, 8, 8>}, {transform_indices = @transform_4, window_bounds = array<i64: 1, 8, 16>}]} {
    %c0 = arith.constant 0 : index
    %c0_0 = arith.constant 0 : index
    %c0_1 = arith.constant 0 : index
    %c0_2 = arith.constant 0 : index
    %0 = vector.load %arg2[%c0, %c0_0, %c0_1, %c0_2] : memref<1x4x8x8xf32, #tpu.memory_space<vmem>>, vector<1x4x8x8xf32>
    %1 = vector.shape_cast %0 : vector<1x4x8x8xf32> to vector<4x8x8xf32>
    %c0_3 = arith.constant 0 : index
    %c0_4 = arith.constant 0 : index
    %c0_5 = arith.constant 0 : index
    %c0_6 = arith.constant 0 : index
    %2 = vector.load %arg3[%c0_3, %c0_4, %c0_5, %c0_6] : memref<1x4x16x8xf32, #tpu.memory_space<vmem>>, vector<1x4x16x8xf32>
    %3 = vector.shape_cast %2 : vector<1x4x16x8xf32> to vector<4x16x8xf32>
    %c0_7 = arith.constant 0 : index
    %c0_8 = arith.constant 0 : index
    %c0_9 = arith.constant 0 : index
    %c0_10 = arith.constant 0 : index
    %4 = vector.load %arg4[%c0_7, %c0_8, %c0_9, %c0_10] : memref<1x4x16x8xf32, #tpu.memory_space<vmem>>, vector<1x4x16x8xf32>
    %5 = vector.shape_cast %4 : vector<1x4x16x8xf32> to vector<4x16x8xf32>
    "tpu.trace_start"() <{level = 10 : i32, message = "hld,hsd->hls"}> : () -> ()
    %cst = arith.constant dense<0.000000e+00> : vector<4x8x16xf32>
    %6 = tpu.matmul %1, %3, %cst {dimension_numbers = #tpu.dot_dimension_numbers<[2], [2], [1], [1], [0, 0, 0, 1, 1, 1], [0], [0]>} : vector<4x8x8xf32>, vector<4x16x8xf32>, vector<4x8x16xf32> -> vector<4x8x16xf32>
    "tpu.trace_stop"() : () -> ()
    %cst_11 = arith.constant 0.353553385 : f32
    %7 = vector.broadcast %cst_11 : f32 to vector<4x8x16xf32>
    %8 = arith.mulf %6, %7 : vector<4x8x16xf32>
    %cst_12 = arith.constant dense<0xFF800000> : vector<4x8xf32>
    %9 = vector.multi_reduction <maximumf>, %8, %cst_12 [2] : vector<4x8x16xf32> to vector<4x8xf32>
    %10 = vector.shape_cast %9 : vector<4x8xf32> to vector<4x8x1xf32>
    %11 = vector.broadcast %10 : vector<4x8x1xf32> to vector<4x8x16xf32>
    %12 = arith.subf %8, %11 : vector<4x8x16xf32>
    %13 = math.exp %12 : vector<4x8x16xf32>
    %cst_13 = arith.constant dense<0.000000e+00> : vector<4x8xf32>
    %14 = vector.multi_reduction <add>, %13, %cst_13 [2] : vector<4x8x16xf32> to vector<4x8xf32>
    %15 = vector.shape_cast %14 : vector<4x8xf32> to vector<4x8x1xf32>
    %16 = tpu.reciprocal %15 : vector<4x8x1xf32> -> vector<4x8x1xf32>
    "tpu.trace_start"() <{level = 10 : i32, message = "hls,hsd->hld"}> : () -> ()
    %cst_14 = arith.constant dense<0.000000e+00> : vector<4x8x8xf32>
    %17 = tpu.matmul %13, %5, %cst_14 {dimension_numbers = #tpu.dot_dimension_numbers<[2], [1], [1], [2], [0, 0, 0, 1, 1, 2], [0], [0]>} : vector<4x8x16xf32>, vector<4x16x8xf32>, vector<4x8x8xf32> -> vector<4x8x8xf32>
    "tpu.trace_stop"() : () -> ()
    %18 = vector.broadcast %16 : vector<4x8x1xf32> to vector<4x8x8xf32>
    %19 = arith.mulf %17, %18 : vector<4x8x8xf32>
    %c0_15 = arith.constant 0 : index
    %c0_16 = arith.constant 0 : index
    %c0_17 = arith.constant 0 : index
    %c0_18 = arith.constant 0 : index
    %20 = vector.load %arg5[%c0_15, %c0_16, %c0_17, %c0_18] : memref<1x4x8x8xf32, #tpu.memory_space<vmem>>, vector<1x4x8x8xf32>
    %21 = vector.shape_cast %20 : vector<1x4x8x8xf32> to vector<4x8x8xf32>
    %22 = vector.shape_cast %19 : vector<4x8x8xf32> to vector<1x4x8x8xf32>
    tpu.vector_store %arg5[%c0_15, %c0_16, %c0_17, %c0_18], %22 {strides = array<i32>} : memref<1x4x8x8xf32, #tpu.memory_space<vmem>>, vector<1x4x8x8xf32>,
    %23 = vector.broadcast %16 : vector<4x8x1xf32> to vector<4x8x16xf32>
    %24 = arith.mulf %13, %23 : vector<4x8x16xf32>
    %cst_19 = arith.constant dense<0.000000e+00> : vector<8x16xf32>
    %25 = vector.multi_reduction <add>, %24, %cst_19 [0] : vector<4x8x16xf32> to vector<8x16xf32>
    %cst_20 = arith.constant 2.500000e-01 : f32
    %26 = vector.broadcast %cst_20 : f32 to vector<8x16xf32>
    %27 = arith.mulf %25, %26 : vector<8x16xf32>
    %c0_21 = arith.constant 0 : index
    %c0_22 = arith.constant 0 : index
    %c0_23 = arith.constant 0 : index
    %28 = vector.load %arg6[%c0_21, %c0_22, %c0_23] : memref<1x8x16xf32, #tpu.memory_space<vmem>>, vector<1x8x16xf32>
    %29 = vector.shape_cast %28 : vector<1x8x16xf32> to vector<8x16xf32>
    %30 = vector.shape_cast %27 : vector<8x16xf32> to vector<1x8x16xf32>
    tpu.vector_store %arg6[%c0_21, %c0_22, %c0_23], %30 {strides = array<i32>} : memref<1x8x16xf32, #tpu.memory_space<vmem>>, vector<1x8x16xf32>,
    return
  }
  func.func @transform_0(%arg0: i32, %arg1: i32) -> (i32, i32, i32, i32) {
    %c0_i32 = arith.constant 0 : i32
    %c0_i32_0 = arith.constant 0 : i32
    %c0_i32_1 = arith.constant 0 : i32
    return %arg0, %c0_i32, %arg1, %c0_i32_0 : i32, i32, i32, i32
  }
  func.func @transform_1(%arg0: i32, %arg1: i32) -> (i32, i32, i32, i32) {
    %c0_i32 = arith.constant 0 : i32
    %c0_i32_0 = arith.constant 0 : i32
    %c0_i32_1 = arith.constant 0 : i32
    %c0_i32_2 = arith.constant 0 : i32
    return %arg0, %c0_i32, %c0_i32_0, %c0_i32_1 : i32, i32, i32, i32
  }
  func.func @transform_2(%arg0: i32, %arg1: i32) -> (i32, i32, i32, i32) {
    %c0_i32 = arith.constant 0 : i32
    %c0_i32_0 = arith.constant 0 : i32
    %c0_i32_1 = arith.constant 0 : i32
    %c0_i32_2 = arith.constant 0 : i32
    return %arg0, %c0_i32, %c0_i32_0, %c0_i32_1 : i32, i32, i32, i32
  }
  func.func @transform_3(%arg0: i32, %arg1: i32) -> (i32, i32, i32, i32) {
    %c0_i32 = arith.constant 0 : i32
    %c0_i32_0 = arith.constant 0 : i32
    %c0_i32_1 = arith.constant 0 : i32
    return %arg0, %c0_i32, %arg1, %c0_i32_0 : i32, i32, i32, i32
  }
  func.func @transform_4(%arg0: i32, %arg1: i32) -> (i32, i32, i32) {
    %c0_i32 = arith.constant 0 : i32
    %c0_i32_0 = arith.constant 0 : i32
    return %arg0, %arg1, %c0_i32 : i32, i32, i32
  }
}

</mosaic_0001>

<llo_original>
// kernel: tpu_custom_call.1
$region0: #{tpu_custom_call.1}
  #allocation0 [shape = 'u32[]', space=smem, size = 0x4, offset = 0x4, fixed_abs, tag = 'smem constant byte address 0x4 - core index']
  #allocation1 [shape = 'u32[72,128]{1,0:T(1,128)}', space=vmem, size = 0x9000, scoped, tag = 'internal scratch']
  %s0 = inlined_call_operand.vmem [shape: f32[2,4,16,8], index: 0, kind: input, shape index: {}]
  %s1 = inlined_call_operand.vmem [shape: f32[2,4,16,8], index: 1, kind: input, shape index: {}]
  %s2 = inlined_call_operand.vmem [shape: f32[2,4,16,8], index: 2, kind: input, shape index: {}]
  %s3 = inlined_call_operand.vmem [shape: f32[2,4,16,8], index: 3, kind: output, shape index: {0}]
  %s4 = inlined_call_operand.hbm [shape: f32[2,16,16], index: 4, kind: output, shape index: {1}]
  %5 = xla_tuple %s3, %s4
  %s6 = sld [smem:[#allocation0]]
  $region125: #{tpu_custom_call.1} parent=0
    _
  %s8 = ssub.s32 1, %s6
  %s9 = scalar_select 0, %s8, %s6
  $region1: #{tpu_custom_call.1} parent=0
    #allocation2 [shape = 'u8[32768]{0}', space=vmem, size = 0x8000, scoped, tag = 'input window, operand 0']
    #allocation3 [shape = 'u8[32768]{0}', space=vmem, size = 0x8000, scoped, tag = 'output window, operand 0']
    #allocation4 [shape = 'u8[8192]{0}', space=vmem, size = 0x2000, scoped, tag = 'output window, operand 1']
    #allocation5 [shape = 's32[2]{0}', space=sflag, size = 0x8, scoped, tag = 'scoped memory for tpu_custom_call.1']
    %10 = vsyncpa [#allocation5], 0
    %s11 = scalar_lea.sflag [#allocation5], 1
    %12 = vsyncpa %s11, 0
    loop: start=0, step=1, limit=6
    $region2: #{tpu_custom_call.1} parent=1 // loop_pre_header
      _
    $region3: #{tpu_custom_call.1} parent=1 // loop_header
      %s14 = sphi 0, %s18
      %p15 = scmp.ge.s32.totalorder %s14, 6
      %s21 = sphi 0, %s33
      %s22 = sphi 0, %s29
      %s23 = sphi 0, %s21
      %s24 = sphi 0, %s22
      %s25 = sphi 0, %s23
      %s26 = sphi 0, %s24
      %s38 = sphi 0, %s40
      %s41 = sphi 0, %s38
      %s42 = sphi 0, %s41
      %s58 = sphi 0, %s42
      %s64 = sphi 0, %s66
      %s67 = sphi 0, %s64
      %s68 = sphi 0, %s67
      %s84 = sphi 0, %s68
      %s90 = sphi 0, %s92
      %s93 = sphi 0, %s90
      %s94 = sphi 0, %s93
      %s110 = sphi 0, %s94
      %s118 = sphi 0, %s120
      %s121 = sphi 0, %s118
      %s122 = sphi 0, %s121
      %s138 = sphi 0, %s122
      %s146 = sphi 0, %s148
      %s149 = sphi 0, %s146
      %s150 = sphi 0, %s149
      %s166 = sphi 0, %s150
    $region4: #{tpu_custom_call.1} parent=1 // loop_header_branch
      %17 = sbr.rel (%p15) target = $region8
    $region5: #{tpu_custom_call.1} parent=1 // loop_body
      %s19 = ssub.s32 %s14, 1
      %s20 = ssub.s32 %s14, 2
      %s27 = sadd.s32 1, %s22
      %p28 = scmp.ge.s32.totalorder %s27, 2
      %s29 = scalar_select %p28, 0, %s27
      %s30 = sadd.s32 1, %s21
      %s31 = scalar_select %p28, %s30, %s21
      %p32 = scmp.ge.s32.totalorder %s31, 2
      %s33 = scalar_select %p32, 0, %s31
      %s34 = ssub.s32 %s21, %s33
      %s35 = ssub.s32 %s22, %s29
      %s36 = sor.u32 %s34, %s35
      %p37 = scmp.eq.s32.totalorder %s36, 0
      %s39 = sadd.s32 %s38, 1
      %s40 = scalar_select %p37, %s38, %s39
      %p43 = pneg %p37
      %p44 = scmp.eq.s32.totalorder %s14, 3
      %p45 = por %p43, %p44
      %p46 = scmp.ne.s32.totalorder %s38, %s41
      %p47 = scmp.eq.s32.totalorder %s14, 0
      %p48 = por %p46, %p47
      %p49 = scmp.ne.s32.totalorder %s38, %s41
      %p50 = scmp.eq.s32.totalorder %s19, 3
      %p51 = por %p49, %p50
      %p52 = scmp.ne.s32.totalorder %s41, %s42
      %p53 = scmp.eq.s32.totalorder %s19, 0
      %p54 = por %p52, %p53
      %p55 = scmp.ne.s32.totalorder %s41, %s42
      %p56 = scmp.eq.s32.totalorder %s20, 3
      %p57 = por %p55, %p56
      %p59 = scmp.ne.s32.totalorder %s42, %s58
      %p60 = scmp.eq.s32.totalorder %s20, 0
      %p61 = por %p59, %p60
      %s62 = ssub.s32 %s21, %s33
      %p63 = scmp.eq.s32.totalorder %s62, 0
      %s65 = sadd.s32 %s64, 1
      %s66 = scalar_select %p63, %s64, %s65
      %p69 = pneg %p63
      %p70 = scmp.eq.s32.totalorder %s14, 3
      %p71 = por %p69, %p70
      %p72 = scmp.ne.s32.totalorder %s64, %s67
      %p73 = scmp.eq.s32.totalorder %s14, 0
      %p74 = por %p72, %p73
      %p75 = scmp.ne.s32.totalorder %s64, %s67
      %p76 = scmp.eq.s32.totalorder %s19, 3
      %p77 = por %p75, %p76
      %p78 = scmp.ne.s32.totalorder %s67, %s68
      %p79 = scmp.eq.s32.totalorder %s19, 0
      %p80 = por %p78, %p79
      %p81 = scmp.ne.s32.totalorder %s67, %s68
      %p82 = scmp.eq.s32.totalorder %s20, 3
      %p83 = por %p81, %p82
      %p85 = scmp.ne.s32.totalorder %s68, %s84
      %p86 = scmp.eq.s32.totalorder %s20, 0
      %p87 = por %p85, %p86
      %s88 = ssub.s32 %s21, %s33
      %p89 = scmp.eq.s32.totalorder %s88, 0
      %s91 = sadd.s32 %s90, 1
      %s92 = scalar_select %p89, %s90, %s91
      %p95 = pneg %p89
      %p96 = scmp.eq.s32.totalorder %s14, 3
      %p97 = por %p95, %p96
      %p98 = scmp.ne.s32.totalorder %s90, %s93
      %p99 = scmp.eq.s32.totalorder %s14, 0
      %p100 = por %p98, %p99
      %p101 = scmp.ne.s32.totalorder %s90, %s93
      %p102 = scmp.eq.s32.totalorder %s19, 3
      %p103 = por %p101, %p102
      %p104 = scmp.ne.s32.totalorder %s93, %s94
      %p105 = scmp.eq.s32.totalorder %s19, 0
      %p106 = por %p104, %p105
      %p107 = scmp.ne.s32.totalorder %s93, %s94
      %p108 = scmp.eq.s32.totalorder %s20, 3
      %p109 = por %p107, %p108
      %p111 = scmp.ne.s32.totalorder %s94, %s110
      %p112 = scmp.eq.s32.totalorder %s20, 0
      %p113 = por %p111, %p112
      %s114 = ssub.s32 %s21, %s33
      %s115 = ssub.s32 %s22, %s29
      %s116 = sor.u32 %s114, %s115
      %p117 = scmp.eq.s32.totalorder %s116, 0
      %s119 = sadd.s32 %s118, 1
      %s120 = scalar_select %p117, %s118, %s119
      %p123 = pneg %p117
      %p124 = scmp.eq.s32.totalorder %s14, 3
      %p125 = por %p123, %p124
      %p126 = scmp.ne.s32.totalorder %s118, %s121
      %p127 = scmp.eq.s32.totalorder %s14, 0
      %p128 = por %p126, %p127
      %p129 = scmp.ne.s32.totalorder %s118, %s121
      %p130 = scmp.eq.s32.totalorder %s19, 3
      %p131 = por %p129, %p130
      %p132 = scmp.ne.s32.totalorder %s121, %s122
      %p133 = scmp.eq.s32.totalorder %s19, 0
      %p134 = por %p132, %p133
      %p135 = scmp.ne.s32.totalorder %s121, %s122
      %p136 = scmp.eq.s32.totalorder %s20, 3
      %p137 = por %p135, %p136
      %p139 = scmp.ne.s32.totalorder %s122, %s138
      %p140 = scmp.eq.s32.totalorder %s20, 0
      %p141 = por %p139, %p140
      %s142 = ssub.s32 %s21, %s33
      %s143 = ssub.s32 %s22, %s29
      %s144 = sor.u32 %s142, %s143
      %p145 = scmp.eq.s32.totalorder %s144, 0
      %s147 = sadd.s32 %s146, 1
      %s148 = scalar_select %p145, %s146, %s147
      %p151 = pneg %p145
      %p152 = scmp.eq.s32.totalorder %s14, 3
      %p153 = por %p151, %p152
      %p154 = scmp.ne.s32.totalorder %s146, %s149
      %p155 = scmp.eq.s32.totalorder %s14, 0
      %p156 = por %p154, %p155
      %p157 = scmp.ne.s32.totalorder %s146, %s149
      %p158 = scmp.eq.s32.totalorder %s19, 3
      %p159 = por %p157, %p158
      %p160 = scmp.ne.s32.totalorder %s149, %s150
      %p161 = scmp.eq.s32.totalorder %s19, 0
      %p162 = por %p160, %p161
      %p163 = scmp.ne.s32.totalorder %s149, %s150
      %p164 = scmp.eq.s32.totalorder %s20, 3
      %p165 = por %p163, %p164
      %p167 = scmp.ne.s32.totalorder %s150, %s166
      %p168 = scmp.eq.s32.totalorder %s20, 0
      %p169 = por %p167, %p168
      %p170 = scmp.le.s32.totalorder 1, %s14
      %p171 = scmp.lt.s32.totalorder %s14, 5
      %p172 = pnand %p170, %p171
      %p173 = pneg %p172
      // Predicated region
      $region9: #{tpu_custom_call.1} parent=5 // pred_check
        _
      $region10: #{tpu_custom_call.1} parent=5 // pred_check_branch
        %175 = sbr.rel (%p172) target = $region12
      $region11: #{tpu_custom_call.1} parent=5 // pred_region
        %s176 = ssub.s32 %s14, 1
      $region12: #{tpu_custom_call.1} parent=5 // pred_fallthru
        _
      %p177 = scmp.lt.s32.totalorder %s14, 4
      // Predicated region
      $region13: #{tpu_custom_call.1} parent=5 // pred_check
        %p178 = pneg %p177
      $region14: #{tpu_custom_call.1} parent=5 // pred_check_branch
        %180 = sbr.rel (%p178) target = $region16
      $region15: #{tpu_custom_call.1} parent=5 // pred_region
        // Predicated region
        $region17: #{tpu_custom_call.1} parent=15 // pred_check
          %p181 = pneg %p48
        $region18: #{tpu_custom_call.1} parent=15 // pred_check_branch
          %183 = sbr.rel (%p181) target = $region20
        $region19: #{tpu_custom_call.1} parent=15 // pred_region
          %s184 = sand.u32 %s38, 1
          %s185 = sand.u32 %s38, 1
          %s186 = smul.addr %s185, 32
          %s187 = scalar_lea.vmem [#allocation2], %s186
          %s188 = smul.addr %s21, 8
          %s189 = sadd.s32 %s22, %s188
          %s190 = smul.addr %s189, 8
          %s191 = scalar_lea.vmem %s0, %s190
          // Predicated region
          $region21: #{tpu_custom_call.1} parent=19 // pred_check
            _
          $region22: #{tpu_custom_call.1} parent=19 // pred_check_branch
            %193 = sbr.rel (0) target = $region24
          $region23: #{tpu_custom_call.1} parent=19 // pred_region
            // Predicated region
            $region25: #{tpu_custom_call.1} parent=23 // pred_check
              _
            $region26: #{tpu_custom_call.1} parent=23 // pred_check_branch
              %195 = sbr.rel (0) target = $region28
            $region27: #{tpu_custom_call.1} parent=23 // pred_region
              // Predicated region
              $region40: #{tpu_custom_call.1} parent=27 // pred_check
                _
              $region41: #{tpu_custom_call.1} parent=27 // pred_check_branch
                %217 = sbr.rel (0) target = $region43
              $region42: #{tpu_custom_call.1} parent=27 // pred_region
                loop: start=0, step=1, limit=1
                $region44: #{tpu_custom_call.1} parent=42 // loop_pre_header
                  _
                $region45: #{tpu_custom_call.1} parent=42 // loop_header
                  %s219 = sphi 0, %s223
                  %p220 = scmp.ge.s32.totalorder %s219, 1
                  %s224 = sphi %s191, %s191
                  %s225 = sphi %s187, %s187
                $region46: #{tpu_custom_call.1} parent=42 // loop_header_branch
                  %222 = sbr.rel (%p220) target = $region50
                $region47: #{tpu_custom_call.1} parent=42 // loop_body
                  %v226 = vld [vmem:[%s224] sm:$0xff]
                  %227 = vst [vmem:[%s225] sm:$0xff] %v226
                  %v228 = vld [vmem:[%s224 + $0x10] sm:$0xff]
                  %229 = vst [vmem:[%s225 + $0x8] sm:$0xff] %v228
                  %v230 = vld [vmem:[%s224 + $0x20] sm:$0xff]
                  %231 = vst [vmem:[%s225 + $0x10] sm:$0xff] %v230
                  %v232 = vld [vmem:[%s224 + $0x30] sm:$0xff]
                  %233 = vst [vmem:[%s225 + $0x18] sm:$0xff] %v232
                $region48: #{tpu_custom_call.1} parent=42 // loop_footer
                  %s223 = sadd.s32 1, %s219
                $region49: #{tpu_custom_call.1} parent=42 // loop_footer_branch
                  %218 = sbr.rel target = $region45
                $region50: #{tpu_custom_call.1} parent=42 // loop_exit
                  _
              $region43: #{tpu_custom_call.1} parent=27 // pred_fallthru
                _
              // Predicated region
              $region51: #{tpu_custom_call.1} parent=27 // pred_check
                _
              $region52: #{tpu_custom_call.1} parent=27 // pred_check_branch
                %235 = sbr.rel target = $region54
              $region53: #{tpu_custom_call.1} parent=27 // pred_region
                _
              $region54: #{tpu_custom_call.1} parent=27 // pred_fallthru
                _
            $region28: #{tpu_custom_call.1} parent=23 // pred_fallthru
              _
            // Predicated region
            $region29: #{tpu_custom_call.1} parent=23 // pred_check
              _
            $region30: #{tpu_custom_call.1} parent=23 // pred_check_branch
              %197 = sbr.rel target = $region32
            $region31: #{tpu_custom_call.1} parent=23 // pred_region
              %s199 = ssub.s32 256, 1
              loop: start=0, step=1, limit=1
              $region33: #{tpu_custom_call.1} parent=31 // loop_pre_header
                _
              $region34: #{tpu_custom_call.1} parent=31 // loop_header
                %s201 = sphi 0, %s205
                %p202 = scmp.ge.s32.totalorder %s201, 1
                %s206 = sphi %s191, %s191
                %s207 = sphi %s187, %s187
              $region35: #{tpu_custom_call.1} parent=31 // loop_header_branch
                %204 = sbr.rel (%p202) target = $region39
              $region36: #{tpu_custom_call.1} parent=31 // loop_body
                %v208 = vld [vmem:[%s206] sm:%s199]
                %209 = vst [vmem:[%s207] sm:%s199] %v208
                %v210 = vld [vmem:[%s206 + $0x10] sm:%s199]
                %211 = vst [vmem:[%s207 + $0x8] sm:%s199] %v210
                %v212 = vld [vmem:[%s206 + $0x20] sm:%s199]
                %213 = vst [vmem:[%s207 + $0x10] sm:%s199] %v212
                %v214 = vld [vmem:[%s206 + $0x30] sm:%s199]
                %215 = vst [vmem:[%s207 + $0x18] sm:%s199] %v214
              $region37: #{tpu_custom_call.1} parent=31 // loop_footer
                %s205 = sadd.s32 1, %s201
              $region38: #{tpu_custom_call.1} parent=31 // loop_footer_branch
                %200 = sbr.rel target = $region34
              $region39: #{tpu_custom_call.1} parent=31 // loop_exit
                _
            $region32: #{tpu_custom_call.1} parent=23 // pred_fallthru
              _
          $region24: #{tpu_custom_call.1} parent=19 // pred_fallthru
            _
          %236 = vnop
        $region20: #{tpu_custom_call.1} parent=15 // pred_fallthru
          _
        // Predicated region
        $region55: #{tpu_custom_call.1} parent=15 // pred_check
          %p237 = pneg %p74
        $region56: #{tpu_custom_call.1} parent=15 // pred_check_branch
          %239 = sbr.rel (%p237) target = $region58
        $region57: #{tpu_custom_call.1} parent=15 // pred_region
          %p240 = scmp.lt.s32.totalorder %s21, 1
          %s241 = scalar_select %p240, %s21, 1
          %s242 = smul.addr %s241, 8
          %s243 = smul.addr %s242, 8
          %s244 = scalar_lea.vmem %s1, %s243
        $region58: #{tpu_custom_call.1} parent=15 // pred_fallthru
          _
        // Predicated region
        $region59: #{tpu_custom_call.1} parent=15 // pred_check
          %p245 = pneg %p100
        $region60: #{tpu_custom_call.1} parent=15 // pred_check_branch
          %247 = sbr.rel (%p245) target = $region62
        $region61: #{tpu_custom_call.1} parent=15 // pred_region
          %p248 = scmp.lt.s32.totalorder %s21, 1
          %s249 = scalar_select %p248, %s21, 1
          %s250 = smul.addr %s249, 8
          %s251 = smul.addr %s250, 8
          %s252 = scalar_lea.vmem %s2, %s251
        $region62: #{tpu_custom_call.1} parent=15 // pred_fallthru
          _
      $region16: #{tpu_custom_call.1} parent=5 // pred_fallthru
        _
      %p253 = scmp.le.s32.totalorder 1, %s14
      %p254 = scmp.lt.s32.totalorder %s14, 5
      %p255 = pnand %p253, %p254
      %p256 = pneg %p255
      // Predicated region
      $region63: #{tpu_custom_call.1} parent=5 // pred_check
        _
      $region64: #{tpu_custom_call.1} parent=5 // pred_check_branch
        %258 = sbr.rel (%p255) target = $region66
      $region65: #{tpu_custom_call.1} parent=5 // pred_region
        %s259 = ssub.s32 %s14, 1
        %s260 = sand.u32 %s41, 1
        %s261 = sand.u32 %s41, 1
        %s262 = smul.addr %s261, 32
        %s263 = scalar_lea.vmem [#allocation2], %s262
        // Predicated region
        $region67: #{tpu_custom_call.1} parent=65 // pred_check
          %p264 = pneg %p54
        $region68: #{tpu_custom_call.1} parent=65 // pred_check_branch
          %266 = sbr.rel (%p264) target = $region70
        $region69: #{tpu_custom_call.1} parent=65 // pred_region
          _
        $region70: #{tpu_custom_call.1} parent=65 // pred_fallthru
          _
        %s267 = sand.u32 %s41, 1
        %s268 = sand.u32 %s41, 1
        %s269 = smul.addr %s268, 32
        %s270 = scalar_lea.vmem [#allocation2], %s269
        %p271 = pneg %p54
        %p272 = pneg %p51
        %p273 = scmp.lt.s32.totalorder %s23, 1
        %s274 = scalar_select %p273, %s23, 1
        %s275 = smul.addr %s274, 8
        %s276 = smul.addr %s275, 8
        %s277 = scalar_lea.vmem %s1, %s276
        %p278 = pneg %p80
        %p279 = pneg %p77
        %p280 = scmp.lt.s32.totalorder %s23, 1
        %s281 = scalar_select %p280, %s23, 1
        %s282 = smul.addr %s281, 8
        %s283 = smul.addr %s282, 8
        %s284 = scalar_lea.vmem %s2, %s283
        %p285 = pneg %p106
        %p286 = pneg %p103
        %p287 = pneg %p134
        %p288 = pneg %p131
        %s289 = sand.u32 %s121, 1
        %s290 = sand.u32 %s121, 1
        %s291 = smul.addr %s290, 32
        %s292 = scalar_lea.vmem [#allocation3], %s291
        %p293 = pneg %p162
        %p294 = pneg %p159
        %s295 = sand.u32 %s149, 1
        %s296 = scalar_lea.sflag [#allocation5], %s295
        %s297 = sand.u32 %s149, 1
        %s298 = smul.addr %s297, 8
        %s299 = scalar_lea.vmem [#allocation4], %s298
        %p300 = scmp.lt.s32.totalorder %s23, 1
        %s301 = scalar_select %p300, %s23, 1
        %s302 = smul.addr %s301, 8
        %s303 = smul.addr %s302, 8
        %s304 = scalar_lea.vmem %s1, %s303
        %p305 = scmp.lt.s32.totalorder %s23, 1
        %s306 = scalar_select %p305, %s23, 1
        %s307 = smul.addr %s306, 8
        %s308 = smul.addr %s307, 8
        %s309 = scalar_lea.vmem %s2, %s308
        %v310 = vld [vmem:[%s263] sm:$0xff]
        %v311 = vld [vmem:[%s263 + $0x8] sm:$0xff]
        %v312 = vld [vmem:[%s263 + $0x10] sm:$0xff]
        %v313 = vld [vmem:[%s263 + $0x18] sm:$0xff]
        %v314 = vld [vmem:[%s304] sm:$0xff]
        %v315 = vld [vmem:[%s304 + $0x8] sm:$0xff]
        %v316 = vld [vmem:[%s304 + $0x10] sm:$0xff]
        %v317 = vld [vmem:[%s304 + $0x18] sm:$0xff]
        %v318 = vld [vmem:[%s304 + $0x20] sm:$0xff]
        %v319 = vld [vmem:[%s304 + $0x28] sm:$0xff]
        %v320 = vld [vmem:[%s304 + $0x30] sm:$0xff]
        %v321 = vld [vmem:[%s304 + $0x38] sm:$0xff]
        %v322 = vld [vmem:[%s309] sm:$0xff]
        %v323 = vld [vmem:[%s309 + $0x8] sm:$0xff]
        %v324 = vld [vmem:[%s309 + $0x10] sm:$0xff]
        %v325 = vld [vmem:[%s309 + $0x18] sm:$0xff]
        %v326 = vld [vmem:[%s309 + $0x20] sm:$0xff]
        %v327 = vld [vmem:[%s309 + $0x28] sm:$0xff]
        %v328 = vld [vmem:[%s309 + $0x30] sm:$0xff]
        %v329 = vld [vmem:[%s309 + $0x38] sm:$0xff]
        %vm330 = vcmask 64512
        %v332 = vsel %vm330, %v310, 0
        %v335 = vsel %vm330, %v314, 0
        %v338 = vsel %vm330, %v315, 0
        %340 = vmatpush.xpose.msra.mxu0 0.0
        %341 = vmatpush.xpose.msra.mxu0 0.0
        %342 = vmatpush.xpose.msra.mxu0 0.0
        %343 = vmatpush.xpose.msra.mxu0 0.0
        %344 = vmatpush.xpose.msra.mxu0 0.0
        %345 = vmatpush.xpose.msra.mxu0 0.0
        %346 = vmatpush.xpose.msra.mxu0 0.0
        %347 = vmatpush.xpose.msra.mxu0 0.0
        %348 = vmatpush.xpose.msra.mxu0 0.0
        %349 = vmatpush.xpose.msra.mxu0 0.0
        %350 = vmatpush.xpose.msra.mxu0 0.0
        %351 = vmatpush.xpose.msra.mxu0 0.0
        %352 = vmatpush.xpose.msra.mxu0 0.0
        %353 = vmatpush.xpose.msra.mxu0 0.0
        %354 = vmatpush.xpose.msra.mxu0 %v338
        %355 = vmatpush.xpose.msra.mxu0 %v335
        %356 = vmatmul.f32.gmra.mxu0 %v332
        %v357 = vpop.f32.mrf.mxu0
        %v358 = vadd.f32 0.0, %v357
        %359 = vdwg.mxu0
        %v361 = vsel %vm330, %v311, 0
        %v364 = vsel %vm330, %v316, 0
        %v367 = vsel %vm330, %v317, 0
        %369 = vmatpush.xpose.msra.mxu0 0.0
        %370 = vmatpush.xpose.msra.mxu0 0.0
        %371 = vmatpush.xpose.msra.mxu0 0.0
        %372 = vmatpush.xpose.msra.mxu0 0.0
        %373 = vmatpush.xpose.msra.mxu0 0.0
        %374 = vmatpush.xpose.msra.mxu0 0.0
        %375 = vmatpush.xpose.msra.mxu0 0.0
        %376 = vmatpush.xpose.msra.mxu0 0.0
        %377 = vmatpush.xpose.msra.mxu0 0.0
        %378 = vmatpush.xpose.msra.mxu0 0.0
        %379 = vmatpush.xpose.msra.mxu0 0.0
        %380 = vmatpush.xpose.msra.mxu0 0.0
        %381 = vmatpush.xpose.msra.mxu0 0.0
        %382 = vmatpush.xpose.msra.mxu0 0.0
        %383 = vmatpush.xpose.msra.mxu0 %v367
        %384 = vmatpush.xpose.msra.mxu0 %v364
        %385 = vmatmul.f32.gmra.mxu0 %v361
        %v386 = vpop.f32.mrf.mxu0
        %v387 = vadd.f32 0.0, %v386
        %388 = vdwg.mxu0
        %v390 = vsel %vm330, %v312, 0
        %v393 = vsel %vm330, %v318, 0
        %v396 = vsel %vm330, %v319, 0
        %398 = vmatpush.xpose.msra.mxu0 0.0
        %399 = vmatpush.xpose.msra.mxu0 0.0
        %400 = vmatpush.xpose.msra.mxu0 0.0
        %401 = vmatpush.xpose.msra.mxu0 0.0
        %402 = vmatpush.xpose.msra.mxu0 0.0
        %403 = vmatpush.xpose.msra.mxu0 0.0
        %404 = vmatpush.xpose.msra.mxu0 0.0
        %405 = vmatpush.xpose.msra.mxu0 0.0
        %406 = vmatpush.xpose.msra.mxu0 0.0
        %407 = vmatpush.xpose.msra.mxu0 0.0
        %408 = vmatpush.xpose.msra.mxu0 0.0
        %409 = vmatpush.xpose.msra.mxu0 0.0
        %410 = vmatpush.xpose.msra.mxu0 0.0
        %411 = vmatpush.xpose.msra.mxu0 0.0
        %412 = vmatpush.xpose.msra.mxu0 %v396
        %413 = vmatpush.xpose.msra.mxu0 %v393
        %414 = vmatmul.f32.gmra.mxu0 %v390
        %v415 = vpop.f32.mrf.mxu0
        %v416 = vadd.f32 0.0, %v415
        %417 = vdwg.mxu0
        %v419 = vsel %vm330, %v313, 0
        %v422 = vsel %vm330, %v320, 0
        %v425 = vsel %vm330, %v321, 0
        %427 = vmatpush.xpose.msra.mxu0 0.0
        %428 = vmatpush.xpose.msra.mxu0 0.0
        %429 = vmatpush.xpose.msra.mxu0 0.0
        %430 = vmatpush.xpose.msra.mxu0 0.0
        %431 = vmatpush.xpose.msra.mxu0 0.0
        %432 = vmatpush.xpose.msra.mxu0 0.0
        %433 = vmatpush.xpose.msra.mxu0 0.0
        %434 = vmatpush.xpose.msra.mxu0 0.0
        %435 = vmatpush.xpose.msra.mxu0 0.0
        %436 = vmatpush.xpose.msra.mxu0 0.0
        %437 = vmatpush.xpose.msra.mxu0 0.0
        %438 = vmatpush.xpose.msra.mxu0 0.0
        %439 = vmatpush.xpose.msra.mxu0 0.0
        %440 = vmatpush.xpose.msra.mxu0 0.0
        %441 = vmatpush.xpose.msra.mxu0 %v425
        %442 = vmatpush.xpose.msra.mxu0 %v422
        %443 = vmatmul.f32.gmra.mxu0 %v419
        %v444 = vpop.f32.mrf.mxu0
        %v445 = vadd.f32 0.0, %v444
        %446 = vdwg.mxu0
        %v447 = vmul.f32 %v358, 0.35355338
        %v448 = vmul.f32 %v387, 0.35355338
        %v449 = vmul.f32 %v416, 0.35355338
        %v450 = vmul.f32 %v445, 0.35355338
        %vm451 = vcmask 130048
        %v452 = vsel %vm451, %v447, -inf
        %453 = vmax.xlane.f32.xlu0 %v452
        %v454 = vpop.xlane.xlu0 %453
        %v455 = vsel %vm451, %v448, -inf
        %456 = vmax.xlane.f32.xlu0 %v455
        %v457 = vpop.xlane.xlu0 %456
        %v458 = vsel %vm451, %v449, -inf
        %459 = vmax.xlane.f32.xlu0 %v458
        %v460 = vpop.xlane.xlu0 %459
        %v461 = vsel %vm451, %v450, -inf
        %462 = vmax.xlane.f32.xlu0 %v461
        %v463 = vpop.xlane.xlu0 %462
        %v464 = vsub.f32 %v447, %v454
        %v465 = vsub.f32 %v448, %v457
        %v466 = vsub.f32 %v449, %v460
        %v467 = vsub.f32 %v450, %v463
        %v468 = vmul.f32 %v464, 1.442695
        %v469 = vpow.pop %v468
        %v470 = vmul.f32 %v465, 1.442695
        %v471 = vpow.pop %v470
        %v472 = vmul.f32 %v466, 1.442695
        %v473 = vpow.pop %v472
        %v474 = vmul.f32 %v467, 1.442695
        %v475 = vpow.pop %v474
        %v476 = vsel %vm451, %v469, 0.0
        %477 = vadd.xlane.f32.xlu0 %v476
        %v478 = vpop.xlane.xlu0 %477
        %v479 = vsel %vm451, %v471, 0.0
        %480 = vadd.xlane.f32.xlu0 %v479
        %v481 = vpop.xlane.xlu0 %480
        %v482 = vsel %vm451, %v473, 0.0
        %483 = vadd.xlane.f32.xlu0 %v482
        %v484 = vpop.xlane.xlu0 %483
        %v485 = vsel %vm451, %v475, 0.0
        %486 = vadd.xlane.f32.xlu0 %v485
        %v487 = vpop.xlane.xlu0 %486
        %v488 = vrcp.pop %v478
        %v489 = vmul.f32 %v478, %v488
        %v490 = vsub.f32 1.0, %v489
        %v491 = vmul.f32 %v488, %v490
        %v492 = vadd.f32 %v488, %v491
        %vm493 = vweird.f32 %v478
        %vm494 = vweird.f32 %v488
        %vm495 = vmor %vm493, %vm494
        %v496 = vsel %vm495, %v488, %v492
        %v497 = vand.u32 2147483647, %v478
        %vm498 = vcmp.eq.f32.partialorder %v497, 8.507059e+37
        %v499 = vand.u32 %v478, 2147483648
        %v500 = vor.u32 1.1754944e-38, %v499
        %v501 = vsel %vm498, %v500, %v496
        %v502 = vrcp.pop %v481
        %v503 = vmul.f32 %v481, %v502
        %v504 = vsub.f32 1.0, %v503
        %v505 = vmul.f32 %v502, %v504
        %v506 = vadd.f32 %v502, %v505
        %vm507 = vweird.f32 %v481
        %vm508 = vweird.f32 %v502
        %vm509 = vmor %vm507, %vm508
        %v510 = vsel %vm509, %v502, %v506
        %v511 = vand.u32 2147483647, %v481
        %vm512 = vcmp.eq.f32.partialorder %v511, 8.507059e+37
        %v513 = vand.u32 %v481, 2147483648
        %v514 = vor.u32 1.1754944e-38, %v513
        %v515 = vsel %vm512, %v514, %v510
        %v516 = vrcp.pop %v484
        %v517 = vmul.f32 %v484, %v516
        %v518 = vsub.f32 1.0, %v517
        %v519 = vmul.f32 %v516, %v518
        %v520 = vadd.f32 %v516, %v519
        %vm521 = vweird.f32 %v484
        %vm522 = vweird.f32 %v516
        %vm523 = vmor %vm521, %vm522
        %v524 = vsel %vm523, %v516, %v520
        %v525 = vand.u32 2147483647, %v484
        %vm526 = vcmp.eq.f32.partialorder %v525, 8.507059e+37
        %v527 = vand.u32 %v484, 2147483648
        %v528 = vor.u32 1.1754944e-38, %v527
        %v529 = vsel %vm526, %v528, %v524
        %v530 = vrcp.pop %v487
        %v531 = vmul.f32 %v487, %v530
        %v532 = vsub.f32 1.0, %v531
        %v533 = vmul.f32 %v530, %v532
        %v534 = vadd.f32 %v530, %v533
        %vm535 = vweird.f32 %v487
        %vm536 = vweird.f32 %v530
        %vm537 = vmor %vm535, %vm536
        %v538 = vsel %vm537, %v530, %v534
        %v539 = vand.u32 2147483647, %v487
        %vm540 = vcmp.eq.f32.partialorder %v539, 8.507059e+37
        %v541 = vand.u32 %v487, 2147483648
        %v542 = vor.u32 1.1754944e-38, %v541
        %v543 = vsel %vm540, %v542, %v538
        %v545 = vsel %vm451, %v469, 0
        %547 = vmatpush.msra.mxu0 0.0
        %548 = vmatpush.msra.mxu0 0.0
        %549 = vmatpush.msra.mxu0 0.0
        %550 = vmatpush.msra.mxu0 0.0
        %551 = vmatpush.msra.mxu0 0.0
        %552 = vmatpush.msra.mxu0 0.0
        %553 = vmatpush.msra.mxu0 0.0
        %554 = vmatpush.msra.mxu0 0.0
        %555 = vmatpush.msra.mxu0 0.0
        %556 = vmatpush.msra.mxu0 0.0
        %557 = vmatpush.msra.mxu0 0.0
        %558 = vmatpush.msra.mxu0 0.0
        %559 = vmatpush.msra.mxu0 0.0
        %560 = vmatpush.msra.mxu0 0.0
        %561 = vmatpush.msra.mxu0 %v323
        %562 = vmatpush.msra.mxu0 %v322
        %563 = vmatmul.f32.gmra.mxu0 %v545
        %v564 = vpop.f32.mrf.mxu0
        %v565 = vadd.f32 0.0, %v564
        %566 = vdwg.mxu0
        %v568 = vsel %vm451, %v471, 0
        %570 = vmatpush.msra.mxu0 0.0
        %571 = vmatpush.msra.mxu0 0.0
        %572 = vmatpush.msra.mxu0 0.0
        %573 = vmatpush.msra.mxu0 0.0
        %574 = vmatpush.msra.mxu0 0.0
        %575 = vmatpush.msra.mxu0 0.0
        %576 = vmatpush.msra.mxu0 0.0
        %577 = vmatpush.msra.mxu0 0.0
        %578 = vmatpush.msra.mxu0 0.0
        %579 = vmatpush.msra.mxu0 0.0
        %580 = vmatpush.msra.mxu0 0.0
        %581 = vmatpush.msra.mxu0 0.0
        %582 = vmatpush.msra.mxu0 0.0
        %583 = vmatpush.msra.mxu0 0.0
        %584 = vmatpush.msra.mxu0 %v325
        %585 = vmatpush.msra.mxu0 %v324
        %586 = vmatmul.f32.gmra.mxu0 %v568
        %v587 = vpop.f32.mrf.mxu0
        %v588 = vadd.f32 0.0, %v587
        %589 = vdwg.mxu0
        %v591 = vsel %vm451, %v473, 0
        %593 = vmatpush.msra.mxu0 0.0
        %594 = vmatpush.msra.mxu0 0.0
        %595 = vmatpush.msra.mxu0 0.0
        %596 = vmatpush.msra.mxu0 0.0
        %597 = vmatpush.msra.mxu0 0.0
        %598 = vmatpush.msra.mxu0 0.0
        %599 = vmatpush.msra.mxu0 0.0
        %600 = vmatpush.msra.mxu0 0.0
        %601 = vmatpush.msra.mxu0 0.0
        %602 = vmatpush.msra.mxu0 0.0
        %603 = vmatpush.msra.mxu0 0.0
        %604 = vmatpush.msra.mxu0 0.0
        %605 = vmatpush.msra.mxu0 0.0
        %606 = vmatpush.msra.mxu0 0.0
        %607 = vmatpush.msra.mxu0 %v327
        %608 = vmatpush.msra.mxu0 %v326
        %609 = vmatmul.f32.gmra.mxu0 %v591
        %v610 = vpop.f32.mrf.mxu0
        %v611 = vadd.f32 0.0, %v610
        %612 = vdwg.mxu0
        %v614 = vsel %vm451, %v475, 0
        %616 = vmatpush.msra.mxu0 0.0
        %617 = vmatpush.msra.mxu0 0.0
        %618 = vmatpush.msra.mxu0 0.0
        %619 = vmatpush.msra.mxu0 0.0
        %620 = vmatpush.msra.mxu0 0.0
        %621 = vmatpush.msra.mxu0 0.0
        %622 = vmatpush.msra.mxu0 0.0
        %623 = vmatpush.msra.mxu0 0.0
        %624 = vmatpush.msra.mxu0 0.0
        %625 = vmatpush.msra.mxu0 0.0
        %626 = vmatpush.msra.mxu0 0.0
        %627 = vmatpush.msra.mxu0 0.0
        %628 = vmatpush.msra.mxu0 0.0
        %629 = vmatpush.msra.mxu0 0.0
        %630 = vmatpush.msra.mxu0 %v329
        %631 = vmatpush.msra.mxu0 %v328
        %632 = vmatmul.f32.gmra.mxu0 %v614
        %v633 = vpop.f32.mrf.mxu0
        %v634 = vadd.f32 0.0, %v633
        %635 = vdwg.mxu0
        %v636 = vmul.f32 %v565, %v501
        %v637 = vmul.f32 %v588, %v515
        %v638 = vmul.f32 %v611, %v529
        %v639 = vmul.f32 %v634, %v543
        %640 = vst.msk [vmem:[%s292] sm:$0xff] %vm330, %v636
        %641 = vst.msk [vmem:[%s292 + $0x8] sm:$0xff] %vm330, %v637
        %642 = vst.msk [vmem:[%s292 + $0x10] sm:$0xff] %vm330, %v638
        %643 = vst.msk [vmem:[%s292 + $0x18] sm:$0xff] %vm330, %v639
        %v644 = vmul.f32 %v469, %v501
        %v645 = vmul.f32 %v471, %v515
        %v646 = vmul.f32 %v473, %v529
        %v647 = vmul.f32 %v475, %v543
        %v648 = vsel %vm451, %v644, 0.0
        %v649 = vsel %vm451, %v645, 0.0
        %v650 = vadd.f32 %v648, %v649
        %v651 = vsel %vm451, %v646, 0.0
        %v652 = vadd.f32 %v650, %v651
        %v653 = vsel %vm451, %v647, 0.0
        %v654 = vadd.f32 %v652, %v653
        %v655 = vmul.f32 %v654, 0.25
        %656 = vst.msk [vmem:[%s299] sm:$0xff] %vm451, %v655
        %s657 = sand.u32 %s121, 1
        %s658 = sand.u32 %s121, 1
        %s659 = smul.addr %s658, 32
        %s660 = scalar_lea.vmem [#allocation3], %s659
        %s661 = sand.u32 %s149, 1
        %s662 = scalar_lea.sflag [#allocation5], %s661
        %s663 = sand.u32 %s149, 1
        %s664 = smul.addr %s663, 8
        %s665 = scalar_lea.vmem [#allocation4], %s664
        // Predicated region
        $region71: #{tpu_custom_call.1} parent=65 // pred_check
          %p666 = pneg %p131
        $region72: #{tpu_custom_call.1} parent=65 // pred_check_branch
          %668 = sbr.rel (%p666) target = $region74
        $region73: #{tpu_custom_call.1} parent=65 // pred_region
          %s669 = smul.addr %s23, 8
          %s670 = sadd.s32 %s24, %s669
          %s671 = smul.addr %s670, 8
          %s672 = scalar_lea.vmem %s3, %s671
          // Predicated region
          $region75: #{tpu_custom_call.1} parent=73 // pred_check
            _
          $region76: #{tpu_custom_call.1} parent=73 // pred_check_branch
            %674 = sbr.rel (0) target = $region78
          $region77: #{tpu_custom_call.1} parent=73 // pred_region
            // Predicated region
            $region79: #{tpu_custom_call.1} parent=77 // pred_check
              _
            $region80: #{tpu_custom_call.1} parent=77 // pred_check_branch
              %676 = sbr.rel (0) target = $region82
            $region81: #{tpu_custom_call.1} parent=77 // pred_region
              // Predicated region
              $region94: #{tpu_custom_call.1} parent=81 // pred_check
                _
              $region95: #{tpu_custom_call.1} parent=81 // pred_check_branch
                %698 = sbr.rel (0) target = $region97
              $region96: #{tpu_custom_call.1} parent=81 // pred_region
                loop: start=0, step=1, limit=1
                $region98: #{tpu_custom_call.1} parent=96 // loop_pre_header
                  _
                $region99: #{tpu_custom_call.1} parent=96 // loop_header
                  %s700 = sphi 0, %s704
                  %p701 = scmp.ge.s32.totalorder %s700, 1
                  %s705 = sphi %s660, %s660
                  %s706 = sphi %s672, %s672
                $region100: #{tpu_custom_call.1} parent=96 // loop_header_branch
                  %703 = sbr.rel (%p701) target = $region104
                $region101: #{tpu_custom_call.1} parent=96 // loop_body
                  %v707 = vld [vmem:[%s705] sm:$0xff]
                  %708 = vst [vmem:[%s706] sm:$0xff] %v707
                  %v709 = vld [vmem:[%s705 + $0x8] sm:$0xff]
                  %710 = vst [vmem:[%s706 + $0x10] sm:$0xff] %v709
                  %v711 = vld [vmem:[%s705 + $0x10] sm:$0xff]
                  %712 = vst [vmem:[%s706 + $0x20] sm:$0xff] %v711
                  %v713 = vld [vmem:[%s705 + $0x18] sm:$0xff]
                  %714 = vst [vmem:[%s706 + $0x30] sm:$0xff] %v713
                $region102: #{tpu_custom_call.1} parent=96 // loop_footer
                  %s704 = sadd.s32 1, %s700
                $region103: #{tpu_custom_call.1} parent=96 // loop_footer_branch
                  %699 = sbr.rel target = $region99
                $region104: #{tpu_custom_call.1} parent=96 // loop_exit
                  _
              $region97: #{tpu_custom_call.1} parent=81 // pred_fallthru
                _
              // Predicated region
              $region105: #{tpu_custom_call.1} parent=81 // pred_check
                _
              $region106: #{tpu_custom_call.1} parent=81 // pred_check_branch
                %716 = sbr.rel target = $region108
              $region107: #{tpu_custom_call.1} parent=81 // pred_region
                _
              $region108: #{tpu_custom_call.1} parent=81 // pred_fallthru
                _
            $region82: #{tpu_custom_call.1} parent=77 // pred_fallthru
              _
            // Predicated region
            $region83: #{tpu_custom_call.1} parent=77 // pred_check
              _
            $region84: #{tpu_custom_call.1} parent=77 // pred_check_branch
              %678 = sbr.rel target = $region86
            $region85: #{tpu_custom_call.1} parent=77 // pred_region
              %s680 = ssub.s32 256, 1
              loop: start=0, step=1, limit=1
              $region87: #{tpu_custom_call.1} parent=85 // loop_pre_header
                _
              $region88: #{tpu_custom_call.1} parent=85 // loop_header
                %s682 = sphi 0, %s686
                %p683 = scmp.ge.s32.totalorder %s682, 1
                %s687 = sphi %s660, %s660
                %s688 = sphi %s672, %s672
              $region89: #{tpu_custom_call.1} parent=85 // loop_header_branch
                %685 = sbr.rel (%p683) target = $region93
              $region90: #{tpu_custom_call.1} parent=85 // loop_body
                %v689 = vld [vmem:[%s687] sm:%s680]
                %690 = vst [vmem:[%s688] sm:%s680] %v689
                %v691 = vld [vmem:[%s687 + $0x8] sm:%s680]
                %692 = vst [vmem:[%s688 + $0x10] sm:%s680] %v691
                %v693 = vld [vmem:[%s687 + $0x10] sm:%s680]
                %694 = vst [vmem:[%s688 + $0x20] sm:%s680] %v693
                %v695 = vld [vmem:[%s687 + $0x18] sm:%s680]
                %696 = vst [vmem:[%s688 + $0x30] sm:%s680] %v695
              $region91: #{tpu_custom_call.1} parent=85 // loop_footer
                %s686 = sadd.s32 1, %s682
              $region92: #{tpu_custom_call.1} parent=85 // loop_footer_branch
                %681 = sbr.rel target = $region88
              $region93: #{tpu_custom_call.1} parent=85 // loop_exit
                _
            $region86: #{tpu_custom_call.1} parent=77 // pred_fallthru
              _
          $region78: #{tpu_custom_call.1} parent=73 // pred_fallthru
            _
          %717 = vnop
        $region74: #{tpu_custom_call.1} parent=65 // pred_fallthru
          _
        // Predicated region
        $region109: #{tpu_custom_call.1} parent=65 // pred_check
          %p718 = pneg %p159
        $region110: #{tpu_custom_call.1} parent=65 // pred_check_branch
          %720 = sbr.rel (%p718) target = $region112
        $region111: #{tpu_custom_call.1} parent=65 // pred_region
          %722 = vsyncadd %s662, 0
          %s723 = smul.addr %s23, 2
          %s724 = sadd.s32 %s24, %s723
          %s725 = smul.addr %s724, 8
          %s726 = scalar_lea.hbm %s4, %s725
          %s728 = sshll.u32 %s665, 4
          %s729 = int_to_ptr.vmem [resolvable:$true] %s728
          %s730 = sshll.u32 %s726, 4
          %s731 = int_to_ptr.hbm [resolvable:$true] %s730
          %733 = dma.vmem_to_hbm [thread:$0]  %s729, 128, %s731, %s662
        $region112: #{tpu_custom_call.1} parent=65 // pred_fallthru
          _
      $region66: #{tpu_custom_call.1} parent=5 // pred_fallthru
        _
      %p734 = scmp.le.s32.totalorder 2, %s14
      // Predicated region
      $region113: #{tpu_custom_call.1} parent=5 // pred_check
        %p735 = pneg %p734
      $region114: #{tpu_custom_call.1} parent=5 // pred_check_branch
        %737 = sbr.rel (%p735) target = $region116
      $region115: #{tpu_custom_call.1} parent=5 // pred_region
        %s738 = ssub.s32 %s14, 2
        // Predicated region
        $region117: #{tpu_custom_call.1} parent=115 // pred_check
          %p739 = pneg %p137
        $region118: #{tpu_custom_call.1} parent=115 // pred_check_branch
          %741 = sbr.rel (%p739) target = $region120
        $region119: #{tpu_custom_call.1} parent=115 // pred_region
          %s742 = sand.u32 %s122, 1
          %s743 = sand.u32 %s122, 1
          %s744 = smul.addr %s743, 32
          %s745 = scalar_lea.vmem [#allocation3], %s744
        $region120: #{tpu_custom_call.1} parent=115 // pred_fallthru
          _
        // Predicated region
        $region121: #{tpu_custom_call.1} parent=115 // pred_check
          %p746 = pneg %p165
        $region122: #{tpu_custom_call.1} parent=115 // pred_check_branch
          %748 = sbr.rel (%p746) target = $region124
        $region123: #{tpu_custom_call.1} parent=115 // pred_region
          %s749 = sand.u32 %s150, 1
          %s750 = scalar_lea.sflag [#allocation5], %s749
          %s751 = sand.u32 %s150, 1
          %s752 = smul.addr %s751, 8
          %s753 = scalar_lea.vmem [#allocation4], %s752
          %755 = dma.done %s750, 128
        $region124: #{tpu_custom_call.1} parent=115 // pred_fallthru
          _
      $region116: #{tpu_custom_call.1} parent=5 // pred_fallthru
        _
    $region6: #{tpu_custom_call.1} parent=1 // loop_footer
      %s18 = sadd.s32 1, %s14
    $region7: #{tpu_custom_call.1} parent=1 // loop_footer_branch
      %13 = sbr.rel target = $region3
    $region8: #{tpu_custom_call.1} parent=1 // loop_exit
      _
    %756 = vsyncpa [#allocation5], 1
    %s757 = scalar_lea.sflag [#allocation5], 1
    %758 = vsyncpa %s757, 1

</llo_original>
